<compile_context>
chip_gen: v6e
topology: v6e:2x2x1
jax: 0.10.0
libtpu: 0.0.40
codegen_flags: <defaults>
</compile_context>

<pallas_src>
import jax
import jax.numpy as jnp
from jax.experimental import pallas as pl
from jax.experimental.pallas import tpu as pltpu

_LANES = 512          # lane-dense width (multiple of 128) -> unmasked stores
_MAX_TILE_ROWS = 512  # 512 x 512 x 4 B = 1 MiB/tile; 2 pipeline buffers << scoped VMEM


def _round_up(x, m):
    return (x + m - 1) // m * m


def _mock_encoder_kernel(seed_ref, out_ref):
    """Fill one (tile_rows, _LANES) tile with uniform [0, 1) float32.

    seed_ref: SMEM int32[1] scalar seed.
    out_ref : VMEM float32[tile_rows, _LANES] output tile.
    """
    rows, lanes = out_ref.shape
    tile = pl.program_id(0).astype(jnp.uint32)

    # Globally unique 32-bit counter for every element of the whole output
    # slab -> each grid tile produces an independent random stream.
    row = jax.lax.broadcasted_iota(jnp.uint32, (rows, lanes), 0)
    col = jax.lax.broadcasted_iota(jnp.uint32, (rows, lanes), 1)
    ctr = (tile * jnp.uint32(rows) + row) * jnp.uint32(lanes) + col

    seed_u = seed_ref[0].astype(jnp.uint32)
    x = ctr + seed_u * jnp.uint32(0x9E3779B9)

    # lowbias32 integer finalizer (cheap VPU ops, hidden under the vst slot).
    x = x ^ (x >> jnp.uint32(16))
    x = x * jnp.uint32(0x7FEB352D)
    x = x ^ (x >> jnp.uint32(15))
    x = x * jnp.uint32(0x846CA68B)
    x = x ^ (x >> jnp.uint32(16))

    # Top 24 bits -> uniform [0, 1) at float32 mantissa resolution.
    u24 = (x >> jnp.uint32(8)).astype(jnp.int32)
    out_ref[...] = u24.astype(jnp.float32) * jnp.float32(1.0 / (1 << 24))


def mock_encoder_forward(input_ids, attention_mask, embed_dim, seed=0):
    """Pallas equivalent of MockEncoder.forward.

    Args:
      input_ids:      int array [batch, seq]   (only batch dim is used)
      attention_mask: int array [batch, seq]   (unused, kept for API parity)
      embed_dim:      output embedding dimension
      seed:           deterministic seed (torch.rand is nondeterministic; here
                      the noise is reproducible for a given seed)

    Returns:
      float32 array [batch, embed_dim] of uniform [0, 1) values.
    """
    del attention_mask  # unused, same as the reference module
    batch = input_ids.shape[0]
    total = batch * embed_dim

    # Lane-dense slab geometry: (rows, _LANES), padded so tiles divide evenly.
    rows = _round_up(pl.cdiv(total, _LANES), 8)
    tile_rows = min(_MAX_TILE_ROWS, rows)
    rows = _round_up(rows, tile_rows)
    grid = rows // tile_rows

    seed_arr = jnp.array([seed], dtype=jnp.int32)

    flat = pl.pallas_call(
        _mock_encoder_kernel,
        out_shape=jax.ShapeDtypeStruct((rows, _LANES), jnp.float32),
        grid=(grid,),
        in_specs=[pl.BlockSpec(memory_space=pltpu.MemorySpace.SMEM)],
        out_specs=pl.BlockSpec((tile_rows, _LANES), lambda i: (i, 0)),
        compiler_params=pltpu.CompilerParams(
            dimension_semantics=("parallel",)),
        cost_estimate=pl.CostEstimate(
            flops=0, transcendentals=0, bytes_accessed=rows * _LANES * 4),
    )(seed_arr)

    # Wrapper-side layout plumbing back to the module's output shape.
    return flat.reshape(-1)[:total].reshape(batch, embed_dim)


if __name__ == "__main__":
    key = jax.random.PRNGKey(0)
    k_ids, _ = jax.random.split(key)

    batch, seq, embed_dim = 2, 8, 32
    input_ids = jax.random.randint(k_ids, (batch, seq), 0, 1000, dtype=jnp.int32)
    attention_mask = jnp.ones((batch, seq), dtype=jnp.int32)

    out = mock_encoder_forward(input_ids, attention_mask, embed_dim=embed_dim, seed=0)
    out = jax.block_until_ready(out)

    assert out.shape == (batch, embed_dim), out.shape
    assert out.dtype == jnp.float32, out.dtype
    # Values must lie in [0, 1) like torch.rand, and not be degenerate.
    assert bool(jnp.all(out >= 0.0)) and bool(jnp.all(out < 1.0))
    assert float(jnp.std(out)) > 0.05

    print("KERNEL_OK")
</pallas_src>

<mosaic_0001>
module attributes {stable_mosaic.version = 11 : i64} {
  func.func @_mock_encoder_kernel(%arg0: i32, %arg1: memref<1xi32, #tpu.memory_space<smem>>, %arg2: memref<8x512xf32, #tpu.memory_space<vmem>>) attributes {dimension_semantics = [#tpu.dimension_semantics<parallel>], iteration_bounds = array<i64: 1>, scalar_prefetch = 0 : i64, scratch_operands = 0 : i64, tpu.core_type = #tpu.core_type<tc>, window_params = [{transform_indices = @transform_0, window_bounds = array<i64: 1>}, {transform_indices = @transform_1, window_bounds = array<i64: 8, 512>}]} {
    %0 = tpu.iota {dimensions = array<i32: 0>} : vector<8x512xi32>
    %1 = tpu.iota {dimensions = array<i32: 1>} : vector<8x512xi32>
    %c8_i32 = arith.constant 8 : i32
    %2 = arith.muli %arg0, %c8_i32 : i32
    %3 = vector.broadcast %2 : i32 to vector<8x512xi32>
    %4 = arith.addi %3, %0 : vector<8x512xi32>
    %c512_i32 = arith.constant 512 : i32
    %5 = vector.broadcast %c512_i32 : i32 to vector<8x512xi32>
    %6 = arith.muli %4, %5 : vector<8x512xi32>
    %7 = arith.addi %6, %1 : vector<8x512xi32>
    %c0 = arith.constant 0 : index
    %8 = memref.load %arg1[%c0] : memref<1xi32, #tpu.memory_space<smem>>
    %c-1640531527_i32 = arith.constant -1640531527 : i32
    %9 = arith.muli %8, %c-1640531527_i32 : i32
    %10 = vector.broadcast %9 : i32 to vector<8x512xi32>
    %11 = arith.addi %7, %10 : vector<8x512xi32>
    %c16_i32 = arith.constant 16 : i32
    %12 = vector.broadcast %c16_i32 : i32 to vector<8x512xi32>
    %13 = arith.shrui %11, %12 : vector<8x512xi32>
    %14 = arith.xori %11, %13 : vector<8x512xi32>
    %c2146121005_i32 = arith.constant 2146121005 : i32
    %15 = vector.broadcast %c2146121005_i32 : i32 to vector<8x512xi32>
    %16 = arith.muli %14, %15 : vector<8x512xi32>
    %c15_i32 = arith.constant 15 : i32
    %17 = vector.broadcast %c15_i32 : i32 to vector<8x512xi32>
    %18 = arith.shrui %16, %17 : vector<8x512xi32>
    %19 = arith.xori %16, %18 : vector<8x512xi32>
    %c-2073254261_i32 = arith.constant -2073254261 : i32
    %20 = vector.broadcast %c-2073254261_i32 : i32 to vector<8x512xi32>
    %21 = arith.muli %19, %20 : vector<8x512xi32>
    %c16_i32_0 = arith.constant 16 : i32
    %22 = vector.broadcast %c16_i32_0 : i32 to vector<8x512xi32>
    %23 = arith.shrui %21, %22 : vector<8x512xi32>
    %24 = arith.xori %21, %23 : vector<8x512xi32>
    %c8_i32_1 = arith.constant 8 : i32
    %25 = vector.broadcast %c8_i32_1 : i32 to vector<8x512xi32>
    %26 = arith.shrui %24, %25 : vector<8x512xi32>
    %27 = arith.sitofp %26 : vector<8x512xi32> to vector<8x512xf32>
    %cst = arith.constant 5.96046448E-8 : f32
    %28 = vector.broadcast %cst : f32 to vector<8x512xf32>
    %29 = arith.mulf %27, %28 : vector<8x512xf32>
    %c0_2 = arith.constant 0 : index
    %c0_3 = arith.constant 0 : index
    %30 = vector.load %arg2[%c0_2, %c0_3] : memref<8x512xf32, #tpu.memory_space<vmem>>, vector<8x512xf32>
    tpu.vector_store %arg2[%c0_2, %c0_3], %29 {strides = array<i32>} : memref<8x512xf32, #tpu.memory_space<vmem>>, vector<8x512xf32>,
    return
  }
  func.func @transform_0(%arg0: i32) -> i32 {
    %c0_i32 = arith.constant 0 : i32
    %c0_i32_0 = arith.constant 0 : i32
    return %c0_i32 : i32
  }
  func.func @transform_1(%arg0: i32) -> (i32, i32) {
    %c0_i32 = arith.constant 0 : i32
    %c0_i32_0 = arith.constant 0 : i32
    return %arg0, %c0_i32 : i32, i32
  }
}

</mosaic_0001>

<llo_original>
// kernel: tpu_custom_call.1
$region0: #{tpu_custom_call.1}
  #allocation0 [shape = 'u32[]', space=smem, size = 0x4, offset = 0x4, fixed_abs, tag = 'smem constant byte address 0x4 - core index']
  #allocation1 [shape = 'u32[144,128]{1,0:T(1,128)}', space=vmem, size = 0x12000, scoped, tag = 'internal scratch']
  #allocation2 [shape = 's32[1]{0:T(128)S(6)}', space=smem, size = 0x200, scoped, tag = 'scoped memory for tpu_custom_call.1']
  %s0 = inlined_call_operand.<no memory space> [shape: s32[1], index: 0, kind: input, shape index: {}]
  %s1 = inlined_call_operand.hbm [shape: f32[8,512], index: 1, kind: output, shape index: {}]
  %s2 = sld [smem:[#allocation0]]
  $region14: #{tpu_custom_call.1} parent=0
    _
  %s4 = ssub.s32 1, %s2
  %s5 = scalar_select 0, %s4, %s2
  %6 = sst [smem:[#allocation2]] %s0
  $region1: #{tpu_custom_call.1} parent=0
    #allocation3 [shape = 'u8[16384]{0}', space=vmem, size = 0x4000, scoped, tag = 'output window, operand 0, single buffered']
    #allocation4 [shape = 's32[1]{0}', space=sflag, size = 0x4, scoped, tag = 'scoped memory for tpu_custom_call.1']
    %7 = vsyncpa [#allocation4], 0
    // Predicated region
    $region2: #{tpu_custom_call.1} parent=1 // pred_check
      _
    $region3: #{tpu_custom_call.1} parent=1 // pred_check_branch
      %9 = sbr.rel (0) target = $region5
    $region4: #{tpu_custom_call.1} parent=1 // pred_region
      _
    $region5: #{tpu_custom_call.1} parent=1 // pred_fallthru
      _
    %v10 = vlaneseq
    %v11 = vshrl.u32 %v10, 7
    %v12 = vlaneseq
    %v13 = vand.u32 %v12, 127
    %v14 = vadd.s32 %v13, 128
    %v15 = vadd.s32 %v13, 256
    %v16 = vadd.s32 %v13, 384
    %s17 = smul.u32 0, 8
    %v18 = vstv %s17
    %v19 = vadd.s32 %v18, %v11
    %v20 = vmul.u32 %v19, 512
    %v21 = vadd.s32 %v20, %v13
    %v22 = vadd.s32 %v20, %v14
    %v23 = vadd.s32 %v20, %v15
    %v24 = vadd.s32 %v20, %v16
    %s25 = sld [smem:[#allocation2]]
    %s26 = smul.u32 %s25, 2654435769
    %v27 = vstv %s26
    %v28 = vadd.s32 %v21, %v27
    %v29 = vadd.s32 %v22, %v27
    %v30 = vadd.s32 %v23, %v27
    %v31 = vadd.s32 %v24, %v27
    %v32 = vshrl.u32 %v28, 16
    %v33 = vshrl.u32 %v29, 16
    %v34 = vshrl.u32 %v30, 16
    %v35 = vshrl.u32 %v31, 16
    %v36 = vxor.u32 %v28, %v32
    %v37 = vxor.u32 %v29, %v33
    %v38 = vxor.u32 %v30, %v34
    %v39 = vxor.u32 %v31, %v35
    %v40 = vmul.u32 %v36, 2146121005
    %v41 = vmul.u32 %v37, 2146121005
    %v42 = vmul.u32 %v38, 2146121005
    %v43 = vmul.u32 %v39, 2146121005
    %v44 = vshrl.u32 %v40, 15
    %v45 = vshrl.u32 %v41, 15
    %v46 = vshrl.u32 %v42, 15
    %v47 = vshrl.u32 %v43, 15
    %v48 = vxor.u32 %v40, %v44
    %v49 = vxor.u32 %v41, %v45
    %v50 = vxor.u32 %v42, %v46
    %v51 = vxor.u32 %v43, %v47
    %v52 = vmul.u32 %v48, 2221713035
    %v53 = vmul.u32 %v49, 2221713035
    %v54 = vmul.u32 %v50, 2221713035
    %v55 = vmul.u32 %v51, 2221713035
    %v56 = vshrl.u32 %v52, 16
    %v57 = vshrl.u32 %v53, 16
    %v58 = vshrl.u32 %v54, 16
    %v59 = vshrl.u32 %v55, 16
    %v60 = vxor.u32 %v52, %v56
    %v61 = vxor.u32 %v53, %v57
    %v62 = vxor.u32 %v54, %v58
    %v63 = vxor.u32 %v55, %v59
    %v64 = vshrl.u32 %v60, 8
    %v65 = vshrl.u32 %v61, 8
    %v66 = vshrl.u32 %v62, 8
    %v67 = vshrl.u32 %v63, 8
    %v68 = vcvt.s32.f32 %v64
    %v69 = vcvt.s32.f32 %v65
    %v70 = vcvt.s32.f32 %v66
    %v71 = vcvt.s32.f32 %v67
    %v72 = vmul.f32 %v68, 5.9604645e-08
    %v73 = vmul.f32 %v69, 5.9604645e-08
    %v74 = vmul.f32 %v70, 5.9604645e-08
    %v75 = vmul.f32 %v71, 5.9604645e-08
    %76 = vst [vmem:[#allocation3] sm:$0xff] %v72
    %77 = vst [vmem:[#allocation3 + $0x8] sm:$0xff] %v73
    %78 = vst [vmem:[#allocation3 + $0x10] sm:$0xff] %v74
    %79 = vst [vmem:[#allocation3 + $0x18] sm:$0xff] %v75
    // Predicated region
    $region6: #{tpu_custom_call.1} parent=1 // pred_check
      _
    $region7: #{tpu_custom_call.1} parent=1 // pred_check_branch
      %81 = sbr.rel (0) target = $region9
    $region8: #{tpu_custom_call.1} parent=1 // pred_region
      %s83 = ssub.s32 512, 512
      %84 = vsyncadd [#allocation4], %s83
      %s86 = sshll.u32 [#allocation3], 4
      %s87 = int_to_ptr.vmem [resolvable:$true] %s86
      %89 = dma.vmem_to_hbm [thread:$0]  %s87, 512, %s1, [#allocation4]
    $region9: #{tpu_custom_call.1} parent=1 // pred_fallthru
      _
    // Predicated region
    $region10: #{tpu_custom_call.1} parent=1 // pred_check
      _
    $region11: #{tpu_custom_call.1} parent=1 // pred_check_branch
      %91 = sbr.rel (0) target = $region13
    $region12: #{tpu_custom_call.1} parent=1 // pred_region
      %92 = dma.done [#allocation4], 512
    $region13: #{tpu_custom_call.1} parent=1 // pred_fallthru
      _
    %93 = vsyncpa [#allocation4], 1

</llo_original>
